<compile_context>
chip_gen: v7x
topology: tpu7x:2x2x1
jax: 0.10.0
libtpu: 0.0.40
codegen_flags: <defaults>
</compile_context>

<pallas_src>
import functools

import jax
import jax.numpy as jnp
from jax.experimental import pallas as pl
from jax.experimental.pallas import tpu as pltpu


# ----------------------------------------------------------------------------
# K1: fused  [cv1 | cv2]  (C1 -> 2c_)  +  Bottleneck.cv1  (c_ -> c_)
# ----------------------------------------------------------------------------
def _k1_kernel(x_ref, w12_ref, b12_ref, wb1_ref, bb1_ref,
               y1_ref, y2_ref, h_ref, *, c_):
    x = x_ref[...]                                                     # (tm, C1) bf16
    y = jnp.dot(x, w12_ref[...], preferred_element_type=jnp.float32)   # MXU, f32 acc
    y = y + b12_ref[...]
    y = y * jax.nn.sigmoid(y)                                          # SiLU (f32)
    y1 = y[:, :c_]                                                     # cv1 branch
    y2 = y[:, c_:]                                                     # cv2 branch
    y1_ref[...] = y1.astype(y1_ref.dtype)
    y2_ref[...] = y2.astype(y2_ref.dtype)

    h = jnp.dot(y1.astype(jnp.bfloat16), wb1_ref[...],                 # Bottleneck.cv1
                preferred_element_type=jnp.float32)
    h = h + bb1_ref[...]
    h = h * jax.nn.sigmoid(h)
    h_ref[...] = h.astype(h_ref.dtype)


def cv12_and_bcv1(x_tok, w12, b12, wb1, bb1, *, c_, tm):
    M, C1 = x_tok.shape
    n2 = w12.shape[1]
    return pl.pallas_call(
        functools.partial(_k1_kernel, c_=c_),
        out_shape=(jax.ShapeDtypeStruct((M, c_), jnp.bfloat16),        # y1
                   jax.ShapeDtypeStruct((M, c_), jnp.bfloat16),        # y2
                   jax.ShapeDtypeStruct((M, c_), jnp.bfloat16)),       # h
        grid=(M // tm,),
        in_specs=[
            pl.BlockSpec((tm, C1), lambda i: (i, 0)),
            pl.BlockSpec((C1, n2), lambda i: (0, 0)),
            pl.BlockSpec((1, n2), lambda i: (0, 0)),
            pl.BlockSpec((c_, c_), lambda i: (0, 0)),
            pl.BlockSpec((1, c_), lambda i: (0, 0)),
        ],
        out_specs=(pl.BlockSpec((tm, c_), lambda i: (i, 0)),
                   pl.BlockSpec((tm, c_), lambda i: (i, 0)),
                   pl.BlockSpec((tm, c_), lambda i: (i, 0))),
        compiler_params=pltpu.CompilerParams(dimension_semantics=("parallel",)),
    )(x_tok, w12, b12, wb1, bb1)


# ----------------------------------------------------------------------------
# K2 (fused): Bottleneck.cv2 3x3 conv + SiLU + residual  ->  cv3 + SiLU
#   - h is staged into an overhung VMEM buffer (pad folded in-kernel); each 3x3
#     tap is one shifted (H*W, c_) @ (c_, c_) MXU matmul; out-of-image / wrapped
#     positions are removed with broadcasted-iota border masks.
#   - cv3 consumes the virtual concat [m, y2] as two partial matmuls, so the
#     bottleneck output never touches HBM.
# ----------------------------------------------------------------------------
def _k2_kernel(h_ref, y1_ref, y2_ref, wt_ref, bt_ref,
               w3a_ref, w3b_ref, b3_ref, o_ref, hp_ref, *, H, W, c_, pad):
    HW = H * W

    # Stage h into the overhung buffer (single bulk store, sublane-aligned offset).
    hp_ref[pl.ds(0, pad), :] = jnp.zeros((pad, c_), hp_ref.dtype)
    hp_ref[pl.ds(pad + HW, pad), :] = jnp.zeros((pad, c_), hp_ref.dtype)
    hp_ref[pl.ds(pad, HW), :] = h_ref[0]

    # Border validity masks (implicit zero padding of the 3x3 conv).
    r = jax.lax.broadcasted_iota(jnp.int32, (HW, 1), 0)
    yy = r // W
    xx = r - yy * W
    row_ok = {0: yy >= 1, 2: yy <= H - 2}
    col_ok = {0: xx >= 1, 2: xx <= W - 2}

    acc = jnp.zeros((HW, c_), jnp.float32) + bt_ref[...]
    for dy in range(3):
        for dx in range(3):
            start = pad + (dy - 1) * W + (dx - 1)                      # static offset
            xs = hp_ref[pl.ds(start, HW), :]                           # (HW, c_) bf16
            msk = None
            if dy != 1:
                msk = row_ok[dy]
            if dx != 1:
                msk = col_ok[dx] if msk is None else (msk & col_ok[dx])
            if msk is not None:
                xs = jnp.where(msk, xs, jnp.zeros_like(xs))
            acc = acc + jnp.dot(xs, wt_ref[dy * 3 + dx],
                                preferred_element_type=jnp.float32)
    acc = acc * jax.nn.sigmoid(acc)                                    # SiLU
    m = y1_ref[0].astype(jnp.float32) + acc                            # residual add

    # cv3 epilogue on the virtual concat [m, y2].
    acc3 = jnp.dot(m.astype(jnp.bfloat16), w3a_ref[...],
                   preferred_element_type=jnp.float32)
    acc3 = acc3 + jnp.dot(y2_ref[0], w3b_ref[...],
                          preferred_element_type=jnp.float32)
    acc3 = acc3 + b3_ref[...]
    acc3 = acc3 * jax.nn.sigmoid(acc3)
    o_ref[0] = acc3.astype(o_ref.dtype)                                # one bulk store


def bottleneck_cv3_fused(h_tok, y1_tok, y2_tok, w_taps, bt, w3a, w3b, b3,
                         *, B, H, W, c_):
    HW = H * W
    c2 = w3a.shape[1]
    pad = ((W + 1 + 7) // 8) * 8       # >= W+1 so all shifted reads stay in-bounds
    h3 = h_tok.reshape(B, HW, c_)
    y13 = y1_tok.reshape(B, HW, c_)
    y23 = y2_tok.reshape(B, HW, c_)
    # TODO(synk): at production feature-map sizes (e.g. 80x80, c_>=128) tile this grid
    # spatially ((B, H//Hs) with a manually-DMA'd halo window) so the per-step blocks fit
    # v7x's 64 MiB VMEM / v5e's 16 MiB scoped limit and the grid stays >= 2 for odd B.
    return pl.pallas_call(
        functools.partial(_k2_kernel, H=H, W=W, c_=c_, pad=pad),
        out_shape=jax.ShapeDtypeStruct((B, HW, c2), jnp.float32),
        grid=(B,),
        in_specs=[
            pl.BlockSpec((1, HW, c_), lambda b: (b, 0, 0)),            # h
            pl.BlockSpec((1, HW, c_), lambda b: (b, 0, 0)),            # y1 (residual)
            pl.BlockSpec((1, HW, c_), lambda b: (b, 0, 0)),            # y2 (cv2 branch)
            pl.BlockSpec((9, c_, c_), lambda b: (0, 0, 0)),            # 3x3 taps
            pl.BlockSpec((1, c_), lambda b: (0, 0)),                   # bb2
            pl.BlockSpec((c_, c2), lambda b: (0, 0)),                  # cv3 (m half)
            pl.BlockSpec((c_, c2), lambda b: (0, 0)),                  # cv3 (y2 half)
            pl.BlockSpec((1, c2), lambda b: (0, 0)),                   # b3
        ],
        out_specs=pl.BlockSpec((1, HW, c2), lambda b: (b, 0, 0)),
        scratch_shapes=[pltpu.VMEM((2 * pad + HW, c_), jnp.bfloat16)],
        compiler_params=pltpu.CompilerParams(dimension_semantics=("parallel",)),
    )(h3, y13, y23, w_taps, bt, w3a, w3b, b3)


# ----------------------------------------------------------------------------
# Parameters: Conv2d weights + BatchNorm stats, folded at init (eval semantics).
# ----------------------------------------------------------------------------
def _fold_bn(w_conv, gamma, beta, mean, var, eps=1e-5):
    s = gamma / jnp.sqrt(var + eps)
    return w_conv * s[:, None, None, None], beta - mean * s


def init_params(key, c1, c2, e=0.5):
    c_ = int(c2 * e)
    ks = iter(jax.random.split(key, 32))

    def conv_bn(cin, cout, k):
        w = jax.random.normal(next(ks), (cout, cin, k, k), jnp.float32) * (0.1 / (k * k))
        gamma = jax.random.uniform(next(ks), (cout,), jnp.float32, 0.5, 1.5)
        beta = jax.random.normal(next(ks), (cout,), jnp.float32) * 0.1
        mean = jax.random.normal(next(ks), (cout,), jnp.float32) * 0.1
        var = jax.random.uniform(next(ks), (cout,), jnp.float32, 0.5, 1.5)
        return _fold_bn(w, gamma, beta, mean, var)

    w1, b1 = conv_bn(c1, c_, 1)            # C3.cv1
    w2, b2 = conv_bn(c1, c_, 1)            # C3.cv2
    wb1, bb1 = conv_bn(c_, c_, 1)          # Bottleneck.cv1 (k=(1,1))
    wb2, bb2 = conv_bn(c_, c_, 3)          # Bottleneck.cv2 (k=(3,3), g=1)
    w3, b3 = conv_bn(2 * c_, c2, 1)        # C3.cv3

    to_mat = lambda w: jnp.transpose(w[:, :, 0, 0], (1, 0))            # (cin, cout)
    taps = jnp.transpose(wb2, (2, 3, 1, 0)).reshape(9, c_, c_)          # (dy*3+dx, cin, cout)
    w3m = to_mat(w3)                                                    # rows: [m_out | cv2_out]

    return {
        "c_": c_,
        "w12": jnp.concatenate([to_mat(w1), to_mat(w2)], axis=1).astype(jnp.bfloat16),
        "b12": jnp.concatenate([b1, b2]).reshape(1, 2 * c_),
        "wb1": to_mat(wb1).astype(jnp.bfloat16),
        "bb1": bb1.reshape(1, c_),
        "wb2": taps.astype(jnp.bfloat16),
        "bb2": bb2.reshape(1, c_),
        "w3a": w3m[:c_].astype(jnp.bfloat16),
        "w3b": w3m[c_:].astype(jnp.bfloat16),
        "b3": b3.reshape(1, c2),
    }


# ----------------------------------------------------------------------------
# Forward
# ----------------------------------------------------------------------------
def _pick_tm(M):
    # Largest M tile that divides M, preferring >= 4 grid steps (pipelining + both
    # v7x TensorCores), relaxing to >= 2 then 1 if needed.
    for min_steps in (4, 2, 1):
        for t in (2048, 1024, 512, 256, 128, 64, 32, 16, 8):
            if M % t == 0 and M // t >= min_steps:
                return t
    return M


def c3_forward(x_nchw, params):
    B, C1, H, W = x_nchw.shape
    c_ = params["c_"]
    M = B * H * W
    tm = _pick_tm(M)

    # NCHW -> channels-last tokens (pure layout change; conv math is identical).
    x_tok = jnp.transpose(x_nchw, (0, 2, 3, 1)).reshape(M, C1).astype(jnp.bfloat16)

    # K1: cv1|cv2 fused + Bottleneck.cv1
    y1, y2, h = cv12_and_bcv1(x_tok, params["w12"], params["b12"],
                              params["wb1"], params["bb1"], c_=c_, tm=tm)

    # K2: Bottleneck.cv2 (3x3 conv) + SiLU + residual, then cv3 fused in the epilogue.
    out = bottleneck_cv3_fused(h, y1, y2, params["wb2"], params["bb2"],
                               params["w3a"], params["w3b"], params["b3"],
                               B=B, H=H, W=W, c_=c_)

    return jnp.transpose(out.reshape(B, H, W, -1), (0, 3, 1, 2))


# ----------------------------------------------------------------------------
# Pure-JAX f32 reference (same BN-folded weights) for a tolerance check.
# ----------------------------------------------------------------------------
def c3_reference(x_nchw, params):
    B, C1, H, W = x_nchw.shape
    c_ = params["c_"]
    x = jnp.transpose(x_nchw, (0, 2, 3, 1)).astype(jnp.float32)
    y = jnp.einsum("bhwc,cd->bhwd", x, params["w12"].astype(jnp.float32)) + params["b12"][0]
    y = y * jax.nn.sigmoid(y)
    y1, y2 = y[..., :c_], y[..., c_:]
    h = jnp.einsum("bhwc,cd->bhwd", y1, params["wb1"].astype(jnp.float32)) + params["bb1"][0]
    h = h * jax.nn.sigmoid(h)
    hp = jnp.pad(h, ((0, 0), (1, 1), (1, 1), (0, 0)))
    acc = jnp.zeros((B, H, W, c_), jnp.float32) + params["bb2"][0]
    taps = params["wb2"].astype(jnp.float32)
    for dy in range(3):
        for dx in range(3):
            acc = acc + jnp.einsum("bhwc,cd->bhwd",
                                   hp[:, dy:dy + H, dx:dx + W, :], taps[dy * 3 + dx])
    acc = acc * jax.nn.sigmoid(acc)
    m = y1 + acc
    o = (jnp.einsum("bhwc,cd->bhwd", m, params["w3a"].astype(jnp.float32))
         + jnp.einsum("bhwc,cd->bhwd", y2, params["w3b"].astype(jnp.float32))
         + params["b3"][0])
    o = o * jax.nn.sigmoid(o)
    return jnp.transpose(o, (0, 3, 1, 2))


# ----------------------------------------------------------------------------
if __name__ == "__main__":
    key = jax.random.PRNGKey(0)
    kx, kp = jax.random.split(key)

    B, C1, H, W = 2, 64, 16, 16
    C2 = 64
    x = jax.random.normal(kx, (B, C1, H, W), jnp.float32)
    params = init_params(kp, C1, C2, e=0.5)

    out = jax.block_until_ready(c3_forward(x, params))
    assert out.shape == (B, C2, H, W)
    assert bool(jnp.all(jnp.isfinite(out)))

    ref = c3_reference(x, params)
    err = float(jnp.max(jnp.abs(out - ref)) / (jnp.max(jnp.abs(ref)) + 1e-6))
    assert err < 6e-2, f"mismatch vs reference: {err}"
    print("KERNEL_OK")
</pallas_src>

<mosaic_0001>
module attributes {stable_mosaic.version = 11 : i64} {
  func.func @_k1_kernel(%arg0: i32, %arg1: memref<128x64xbf16, #tpu.memory_space<vmem>>, %arg2: memref<64x64xbf16, #tpu.memory_space<vmem>>, %arg3: memref<1x64xf32, #tpu.memory_space<vmem>>, %arg4: memref<32x32xbf16, #tpu.memory_space<vmem>>, %arg5: memref<1x32xf32, #tpu.memory_space<vmem>>, %arg6: memref<128x32xbf16, #tpu.memory_space<vmem>>, %arg7: memref<128x32xbf16, #tpu.memory_space<vmem>>, %arg8: memref<128x32xbf16, #tpu.memory_space<vmem>>) attributes {dimension_semantics = [#tpu.dimension_semantics<parallel>], iteration_bounds = array<i64: 4>, scalar_prefetch = 0 : i64, scratch_operands = 0 : i64, tpu.core_type = #tpu.core_type<tc>, window_params = [{transform_indices = @transform_0, window_bounds = array<i64: 128, 64>}, {pipeline_mode = #tpu.pipeline_mode<synchronous>, transform_indices = @transform_1, window_bounds = array<i64: 64, 64>}, {pipeline_mode = #tpu.pipeline_mode<synchronous>, transform_indices = @transform_2, window_bounds = array<i64: 1, 64>}, {pipeline_mode = #tpu.pipeline_mode<synchronous>, transform_indices = @transform_3, window_bounds = array<i64: 32, 32>}, {pipeline_mode = #tpu.pipeline_mode<synchronous>, transform_indices = @transform_4, window_bounds = array<i64: 1, 32>}, {transform_indices = @transform_5, window_bounds = array<i64: 128, 32>}, {transform_indices = @transform_6, window_bounds = array<i64: 128, 32>}, {transform_indices = @transform_7, window_bounds = array<i64: 128, 32>}]} {
    %c0 = arith.constant 0 : index
    %c0_0 = arith.constant 0 : index
    %0 = vector.load %arg1[%c0, %c0_0] : memref<128x64xbf16, #tpu.memory_space<vmem>>, vector<128x64xbf16>
    %c0_1 = arith.constant 0 : index
    %c0_2 = arith.constant 0 : index
    %1 = vector.load %arg2[%c0_1, %c0_2] : memref<64x64xbf16, #tpu.memory_space<vmem>>, vector<64x64xbf16>
    %cst = arith.constant dense<0.000000e+00> : vector<128x64xf32>
    %2 = tpu.matmul %0, %1, %cst {dimension_numbers = #tpu.dot_dimension_numbers<[1], [0], [0], [1], [0, 0, 1, 1], [], []>} : vector<128x64xbf16>, vector<64x64xbf16>, vector<128x64xf32> -> vector<128x64xf32>
    %c0_3 = arith.constant 0 : index
    %c0_4 = arith.constant 0 : index
    %3 = vector.load %arg3[%c0_3, %c0_4] : memref<1x64xf32, #tpu.memory_space<vmem>>, vector<1x64xf32>
    %4 = vector.broadcast %3 : vector<1x64xf32> to vector<128x64xf32>
    %5 = arith.addf %2, %4 : vector<128x64xf32>
    %6 = arith.negf %5 : vector<128x64xf32>
    %7 = math.exp %6 : vector<128x64xf32>
    %cst_5 = arith.constant 1.000000e+00 : f32
    %8 = vector.broadcast %cst_5 : f32 to vector<128x64xf32>
    %9 = arith.addf %8, %7 : vector<128x64xf32>
    %10 = arith.divf %8, %9 : vector<128x64xf32>
    %11 = arith.mulf %5, %10 : vector<128x64xf32>
    %12 = vector.extract_strided_slice %11 {offsets = [0, 0], sizes = [128, 32], strides = [1, 1]} : vector<128x64xf32> to vector<128x32xf32>
    %13 = vector.extract_strided_slice %11 {offsets = [0, 32], sizes = [128, 32], strides = [1, 1]} : vector<128x64xf32> to vector<128x32xf32>
    %14 = arith.truncf %12 : vector<128x32xf32> to vector<128x32xbf16>
    %c0_6 = arith.constant 0 : index
    %c0_7 = arith.constant 0 : index
    %15 = vector.load %arg6[%c0_6, %c0_7] : memref<128x32xbf16, #tpu.memory_space<vmem>>, vector<128x32xbf16>
    tpu.vector_store %arg6[%c0_6, %c0_7], %14 {strides = array<i32>} : memref<128x32xbf16, #tpu.memory_space<vmem>>, vector<128x32xbf16>,
    %16 = arith.truncf %13 : vector<128x32xf32> to vector<128x32xbf16>
    %c0_8 = arith.constant 0 : index
    %c0_9 = arith.constant 0 : index
    %17 = vector.load %arg7[%c0_8, %c0_9] : memref<128x32xbf16, #tpu.memory_space<vmem>>, vector<128x32xbf16>
    tpu.vector_store %arg7[%c0_8, %c0_9], %16 {strides = array<i32>} : memref<128x32xbf16, #tpu.memory_space<vmem>>, vector<128x32xbf16>,
    %18 = arith.truncf %12 : vector<128x32xf32> to vector<128x32xbf16>
    %c0_10 = arith.constant 0 : index
    %c0_11 = arith.constant 0 : index
    %19 = vector.load %arg4[%c0_10, %c0_11] : memref<32x32xbf16, #tpu.memory_space<vmem>>, vector<32x32xbf16>
    %cst_12 = arith.constant dense<0.000000e+00> : vector<128x32xf32>
    %20 = tpu.matmul %18, %19, %cst_12 {dimension_numbers = #tpu.dot_dimension_numbers<[1], [0], [0], [1], [0, 0, 1, 1], [], []>} : vector<128x32xbf16>, vector<32x32xbf16>, vector<128x32xf32> -> vector<128x32xf32>
    %c0_13 = arith.constant 0 : index
    %c0_14 = arith.constant 0 : index
    %21 = vector.load %arg5[%c0_13, %c0_14] : memref<1x32xf32, #tpu.memory_space<vmem>>, vector<1x32xf32>
    %22 = vector.broadcast %21 : vector<1x32xf32> to vector<128x32xf32>
    %23 = arith.addf %20, %22 : vector<128x32xf32>
    %24 = arith.negf %23 : vector<128x32xf32>
    %25 = math.exp %24 : vector<128x32xf32>
    %cst_15 = arith.constant 1.000000e+00 : f32
    %26 = vector.broadcast %cst_15 : f32 to vector<128x32xf32>
    %27 = arith.addf %26, %25 : vector<128x32xf32>
    %28 = arith.divf %26, %27 : vector<128x32xf32>
    %29 = arith.mulf %23, %28 : vector<128x32xf32>
    %30 = arith.truncf %29 : vector<128x32xf32> to vector<128x32xbf16>
    %c0_16 = arith.constant 0 : index
    %c0_17 = arith.constant 0 : index
    %31 = vector.load %arg8[%c0_16, %c0_17] : memref<128x32xbf16, #tpu.memory_space<vmem>>, vector<128x32xbf16>
    tpu.vector_store %arg8[%c0_16, %c0_17], %30 {strides = array<i32>} : memref<128x32xbf16, #tpu.memory_space<vmem>>, vector<128x32xbf16>,
    return
  }
  func.func @transform_0(%arg0: i32) -> (i32, i32) {
    %c0_i32 = arith.constant 0 : i32
    %c0_i32_0 = arith.constant 0 : i32
    return %arg0, %c0_i32 : i32, i32
  }
  func.func @transform_1(%arg0: i32) -> (i32, i32) {
    %c0_i32 = arith.constant 0 : i32
    %c0_i32_0 = arith.constant 0 : i32
    %c0_i32_1 = arith.constant 0 : i32
    return %c0_i32, %c0_i32_0 : i32, i32
  }
  func.func @transform_2(%arg0: i32) -> (i32, i32) {
    %c0_i32 = arith.constant 0 : i32
    %c0_i32_0 = arith.constant 0 : i32
    %c0_i32_1 = arith.constant 0 : i32
    return %c0_i32, %c0_i32_0 : i32, i32
  }
  func.func @transform_3(%arg0: i32) -> (i32, i32) {
    %c0_i32 = arith.constant 0 : i32
    %c0_i32_0 = arith.constant 0 : i32
    %c0_i32_1 = arith.constant 0 : i32
    return %c0_i32, %c0_i32_0 : i32, i32
  }
  func.func @transform_4(%arg0: i32) -> (i32, i32) {
    %c0_i32 = arith.constant 0 : i32
    %c0_i32_0 = arith.constant 0 : i32
    %c0_i32_1 = arith.constant 0 : i32
    return %c0_i32, %c0_i32_0 : i32, i32
  }
  func.func @transform_5(%arg0: i32) -> (i32, i32) {
    %c0_i32 = arith.constant 0 : i32
    %c0_i32_0 = arith.constant 0 : i32
    return %arg0, %c0_i32 : i32, i32
  }
  func.func @transform_6(%arg0: i32) -> (i32, i32) {
    %c0_i32 = arith.constant 0 : i32
    %c0_i32_0 = arith.constant 0 : i32
    return %arg0, %c0_i32 : i32, i32
  }
  func.func @transform_7(%arg0: i32) -> (i32, i32) {
    %c0_i32 = arith.constant 0 : i32
    %c0_i32_0 = arith.constant 0 : i32
    return %arg0, %c0_i32 : i32, i32
  }
}

</mosaic_0001>

<llo_original>
// kernel: tpu_custom_call.1
$region0: #{tpu_custom_call.1}
  #allocation0 [shape = 'u32[]', space=smem, size = 0x4, offset = 0x4, fixed_abs, tag = 'smem constant byte address 0x4 - core index']
  #allocation1 [shape = 'u32[144,128]{1,0:T(1,128)}', space=vmem, size = 0x12000, scoped, tag = 'internal scratch']
  %s0 = inlined_call_operand.vmem [shape: bf16[512,64], index: 0, kind: input, shape index: {}]
  %s1 = inlined_call_operand.vmem [shape: bf16[64,64], index: 1, kind: input, shape index: {}]
  %s2 = inlined_call_operand.vmem [shape: f32[1,64], index: 2, kind: input, shape index: {}]
  %s3 = inlined_call_operand.vmem [shape: bf16[32,32], index: 3, kind: input, shape index: {}]
  %s4 = inlined_call_operand.vmem [shape: f32[1,32], index: 4, kind: input, shape index: {}]
  %s5 = inlined_call_operand.vmem [shape: bf16[512,32], index: 5, kind: output, shape index: {0}]
  %s6 = inlined_call_operand.vmem [shape: bf16[512,32], index: 6, kind: output, shape index: {1}]
  %s7 = inlined_call_operand.vmem [shape: bf16[512,32], index: 7, kind: output, shape index: {2}]
  %8 = xla_tuple %s5, %s6, %s7
  %s9 = sld [smem:[#allocation0]]
  $region69: #{tpu_custom_call.1} parent=0
    _
  %s11 = ssub.s32 1, %s9
  %s12 = scalar_select 0, %s11, %s9
  loop: start=0, step=1, limit=6
  $region2: #{tpu_custom_call.1} parent=0 // loop_pre_header
    _
  $region3: #{tpu_custom_call.1} parent=0 // loop_header
    %s14 = sphi 0, %s18
    %p15 = scmp.ge.s32.totalorder %s14, 6
    %s24 = sphi 0, %s26
    %s27 = sphi 0, %s24
    %s28 = sphi 0, %s27
    %s44 = sphi 0, %s28
    %s48 = sphi 0, %s48
    %s50 = sphi 0, %s48
    %s51 = sphi 0, %s50
    %s65 = sphi 0, %s51
    %s69 = sphi 0, %s69
    %s71 = sphi 0, %s69
    %s72 = sphi 0, %s71
    %s86 = sphi 0, %s72
    %s90 = sphi 0, %s90
    %s92 = sphi 0, %s90
    %s93 = sphi 0, %s92
    %s107 = sphi 0, %s93
    %s111 = sphi 0, %s111
    %s113 = sphi 0, %s111
    %s114 = sphi 0, %s113
    %s128 = sphi 0, %s114
    %s134 = sphi 0, %s136
    %s137 = sphi 0, %s134
    %s138 = sphi 0, %s137
    %s154 = sphi 0, %s138
    %s160 = sphi 0, %s162
    %s163 = sphi 0, %s160
    %s164 = sphi 0, %s163
    %s180 = sphi 0, %s164
    %s186 = sphi 0, %s188
    %s189 = sphi 0, %s186
    %s190 = sphi 0, %s189
    %s206 = sphi 0, %s190
  $region4: #{tpu_custom_call.1} parent=0 // loop_header_branch
    %17 = sbr.rel (%p15) target = $region8
  $region5: #{tpu_custom_call.1} parent=0 // loop_body
    %s19 = ssub.s32 %s14, 1
    %s20 = ssub.s32 %s14, 2
    %s21 = sadd.s32 %s14, 1
    %s22 = ssub.s32 %s14, %s21
    %p23 = scmp.eq.s32.totalorder %s22, 0
    %s25 = sadd.s32 %s24, 1
    %s26 = scalar_select %p23, %s24, %s25
    %p29 = pneg %p23
    %p30 = scmp.eq.s32.totalorder %s14, 3
    %p31 = por %p29, %p30
    %p32 = scmp.ne.s32.totalorder %s24, %s27
    %p33 = scmp.eq.s32.totalorder %s14, 0
    %p34 = por %p32, %p33
    %p35 = scmp.ne.s32.totalorder %s24, %s27
    %p36 = scmp.eq.s32.totalorder %s19, 3
    %p37 = por %p35, %p36
    %p38 = scmp.ne.s32.totalorder %s27, %s28
    %p39 = scmp.eq.s32.totalorder %s19, 0
    %p40 = por %p38, %p39
    %p41 = scmp.ne.s32.totalorder %s27, %s28
    %p42 = scmp.eq.s32.totalorder %s20, 3
    %p43 = por %p41, %p42
    %p45 = scmp.ne.s32.totalorder %s28, %s44
    %p46 = scmp.eq.s32.totalorder %s20, 0
    %p47 = por %p45, %p46
    %s49 = sadd.s32 %s48, 1
    %p52 = scmp.eq.s32.totalorder %s14, 3
    %p53 = scmp.ne.s32.totalorder %s48, %s50
    %p54 = scmp.eq.s32.totalorder %s14, 0
    %p55 = por %p53, %p54
    %p56 = scmp.ne.s32.totalorder %s48, %s50
    %p57 = scmp.eq.s32.totalorder %s19, 3
    %p58 = por %p56, %p57
    %p59 = scmp.ne.s32.totalorder %s50, %s51
    %p60 = scmp.eq.s32.totalorder %s19, 0
    %p61 = por %p59, %p60
    %p62 = scmp.ne.s32.totalorder %s50, %s51
    %p63 = scmp.eq.s32.totalorder %s20, 3
    %p64 = por %p62, %p63
    %p66 = scmp.ne.s32.totalorder %s51, %s65
    %p67 = scmp.eq.s32.totalorder %s20, 0
    %p68 = por %p66, %p67
    %s70 = sadd.s32 %s69, 1
    %p73 = scmp.eq.s32.totalorder %s14, 3
    %p74 = scmp.ne.s32.totalorder %s69, %s71
    %p75 = scmp.eq.s32.totalorder %s14, 0
    %p76 = por %p74, %p75
    %p77 = scmp.ne.s32.totalorder %s69, %s71
    %p78 = scmp.eq.s32.totalorder %s19, 3
    %p79 = por %p77, %p78
    %p80 = scmp.ne.s32.totalorder %s71, %s72
    %p81 = scmp.eq.s32.totalorder %s19, 0
    %p82 = por %p80, %p81
    %p83 = scmp.ne.s32.totalorder %s71, %s72
    %p84 = scmp.eq.s32.totalorder %s20, 3
    %p85 = por %p83, %p84
    %p87 = scmp.ne.s32.totalorder %s72, %s86
    %p88 = scmp.eq.s32.totalorder %s20, 0
    %p89 = por %p87, %p88
    %s91 = sadd.s32 %s90, 1
    %p94 = scmp.eq.s32.totalorder %s14, 3
    %p95 = scmp.ne.s32.totalorder %s90, %s92
    %p96 = scmp.eq.s32.totalorder %s14, 0
    %p97 = por %p95, %p96
    %p98 = scmp.ne.s32.totalorder %s90, %s92
    %p99 = scmp.eq.s32.totalorder %s19, 3
    %p100 = por %p98, %p99
    %p101 = scmp.ne.s32.totalorder %s92, %s93
    %p102 = scmp.eq.s32.totalorder %s19, 0
    %p103 = por %p101, %p102
    %p104 = scmp.ne.s32.totalorder %s92, %s93
    %p105 = scmp.eq.s32.totalorder %s20, 3
    %p106 = por %p104, %p105
    %p108 = scmp.ne.s32.totalorder %s93, %s107
    %p109 = scmp.eq.s32.totalorder %s20, 0
    %p110 = por %p108, %p109
    %s112 = sadd.s32 %s111, 1
    %p115 = scmp.eq.s32.totalorder %s14, 3
    %p116 = scmp.ne.s32.totalorder %s111, %s113
    %p117 = scmp.eq.s32.totalorder %s14, 0
    %p118 = por %p116, %p117
    %p119 = scmp.ne.s32.totalorder %s111, %s113
    %p120 = scmp.eq.s32.totalorder %s19, 3
    %p121 = por %p119, %p120
    %p122 = scmp.ne.s32.totalorder %s113, %s114
    %p123 = scmp.eq.s32.totalorder %s19, 0
    %p124 = por %p122, %p123
    %p125 = scmp.ne.s32.totalorder %s113, %s114
    %p126 = scmp.eq.s32.totalorder %s20, 3
    %p127 = por %p125, %p126
    %p129 = scmp.ne.s32.totalorder %s114, %s128
    %p130 = scmp.eq.s32.totalorder %s20, 0
    %p131 = por %p129, %p130
    %s132 = ssub.s32 %s14, %s21
    %p133 = scmp.eq.s32.totalorder %s132, 0
    %s135 = sadd.s32 %s134, 1
    %s136 = scalar_select %p133, %s134, %s135
    %p139 = pneg %p133
    %p140 = scmp.eq.s32.totalorder %s14, 3
    %p141 = por %p139, %p140
    %p142 = scmp.ne.s32.totalorder %s134, %s137
    %p143 = scmp.eq.s32.totalorder %s14, 0
    %p144 = por %p142, %p143
    %p145 = scmp.ne.s32.totalorder %s134, %s137
    %p146 = scmp.eq.s32.totalorder %s19, 3
    %p147 = por %p145, %p146
    %p148 = scmp.ne.s32.totalorder %s137, %s138
    %p149 = scmp.eq.s32.totalorder %s19, 0
    %p150 = por %p148, %p149
    %p151 = scmp.ne.s32.totalorder %s137, %s138
    %p152 = scmp.eq.s32.totalorder %s20, 3
    %p153 = por %p151, %p152
    %p155 = scmp.ne.s32.totalorder %s138, %s154
    %p156 = scmp.eq.s32.totalorder %s20, 0
    %p157 = por %p155, %p156
    %s158 = ssub.s32 %s14, %s21
    %p159 = scmp.eq.s32.totalorder %s158, 0
    %s161 = sadd.s32 %s160, 1
    %s162 = scalar_select %p159, %s160, %s161
    %p165 = pneg %p159
    %p166 = scmp.eq.s32.totalorder %s14, 3
    %p167 = por %p165, %p166
    %p168 = scmp.ne.s32.totalorder %s160, %s163
    %p169 = scmp.eq.s32.totalorder %s14, 0
    %p170 = por %p168, %p169
    %p171 = scmp.ne.s32.totalorder %s160, %s163
    %p172 = scmp.eq.s32.totalorder %s19, 3
    %p173 = por %p171, %p172
    %p174 = scmp.ne.s32.totalorder %s163, %s164
    %p175 = scmp.eq.s32.totalorder %s19, 0
    %p176 = por %p174, %p175
    %p177 = scmp.ne.s32.totalorder %s163, %s164
    %p178 = scmp.eq.s32.totalorder %s20, 3
    %p179 = por %p177, %p178
    %p181 = scmp.ne.s32.totalorder %s164, %s180
    %p182 = scmp.eq.s32.totalorder %s20, 0
    %p183 = por %p181, %p182
    %s184 = ssub.s32 %s14, %s21
    %p185 = scmp.eq.s32.totalorder %s184, 0
    %s187 = sadd.s32 %s186, 1
    %s188 = scalar_select %p185, %s186, %s187
    %p191 = pneg %p185
    %p192 = scmp.eq.s32.totalorder %s14, 3
    %p193 = por %p191, %p192
    %p194 = scmp.ne.s32.totalorder %s186, %s189
    %p195 = scmp.eq.s32.totalorder %s14, 0
    %p196 = por %p194, %p195
    %p197 = scmp.ne.s32.totalorder %s186, %s189
    %p198 = scmp.eq.s32.totalorder %s19, 3
    %p199 = por %p197, %p198
    %p200 = scmp.ne.s32.totalorder %s189, %s190
    %p201 = scmp.eq.s32.totalorder %s19, 0
    %p202 = por %p200, %p201
    %p203 = scmp.ne.s32.totalorder %s189, %s190
    %p204 = scmp.eq.s32.totalorder %s20, 3
    %p205 = por %p203, %p204
    %p207 = scmp.ne.s32.totalorder %s190, %s206
    %p208 = scmp.eq.s32.totalorder %s20, 0
    %p209 = por %p207, %p208
    %p210 = scmp.le.s32.totalorder 1, %s14
    %p211 = scmp.lt.s32.totalorder %s14, 5
    %p212 = pnand %p210, %p211
    %p213 = pneg %p212
    // Predicated region
    $region9: #{tpu_custom_call.1} parent=5 // pred_check
      _
    $region10: #{tpu_custom_call.1} parent=5 // pred_check_branch
      %215 = sbr.rel (%p212) target = $region12
    $region11: #{tpu_custom_call.1} parent=5 // pred_region
      %s216 = ssub.s32 %s14, 1
      // Predicated region
      $region13: #{tpu_custom_call.1} parent=11 // pred_check
        %p217 = pneg %p61
      $region14: #{tpu_custom_call.1} parent=11 // pred_check_branch
        %219 = sbr.rel (%p217) target = $region16
      $region15: #{tpu_custom_call.1} parent=11 // pred_region
        _
      $region16: #{tpu_custom_call.1} parent=11 // pred_fallthru
        _
      // Predicated region
      $region17: #{tpu_custom_call.1} parent=11 // pred_check
        %p220 = pneg %p82
      $region18: #{tpu_custom_call.1} parent=11 // pred_check_branch
        %222 = sbr.rel (%p220) target = $region20
      $region19: #{tpu_custom_call.1} parent=11 // pred_region
        _
      $region20: #{tpu_custom_call.1} parent=11 // pred_fallthru
        _
      // Predicated region
      $region21: #{tpu_custom_call.1} parent=11 // pred_check
        %p223 = pneg %p103
      $region22: #{tpu_custom_call.1} parent=11 // pred_check_branch
        %225 = sbr.rel (%p223) target = $region24
      $region23: #{tpu_custom_call.1} parent=11 // pred_region
        _
      $region24: #{tpu_custom_call.1} parent=11 // pred_fallthru
        _
      // Predicated region
      $region25: #{tpu_custom_call.1} parent=11 // pred_check
        %p226 = pneg %p124
      $region26: #{tpu_custom_call.1} parent=11 // pred_check_branch
        %228 = sbr.rel (%p226) target = $region28
      $region27: #{tpu_custom_call.1} parent=11 // pred_region
        _
      $region28: #{tpu_custom_call.1} parent=11 // pred_fallthru
        _
    $region12: #{tpu_custom_call.1} parent=5 // pred_fallthru
      _
    %p229 = scmp.lt.s32.totalorder %s14, 4
    // Predicated region
    $region29: #{tpu_custom_call.1} parent=5 // pred_check
      %p230 = pneg %p229
    $region30: #{tpu_custom_call.1} parent=5 // pred_check_branch
      %232 = sbr.rel (%p230) target = $region32
    $region31: #{tpu_custom_call.1} parent=5 // pred_region
      // Predicated region
      $region33: #{tpu_custom_call.1} parent=31 // pred_check
        %p233 = pneg %p34
      $region34: #{tpu_custom_call.1} parent=31 // pred_check_branch
        %235 = sbr.rel (%p233) target = $region36
      $region35: #{tpu_custom_call.1} parent=31 // pred_region
        %s236 = smul.u32 16, %s14
        %p237 = scmp.lt.s32.totalorder %s236, 63
        %s238 = scalar_select %p237, %s236, 63
        %s239 = smul.addr %s238, 4
        %s240 = scalar_lea.vmem %s0, %s239
        %s241 = smul.u32 16, %s14
      $region36: #{tpu_custom_call.1} parent=31 // pred_fallthru
        _
    $region32: #{tpu_custom_call.1} parent=5 // pred_fallthru
      _
    %p242 = scmp.le.s32.totalorder 1, %s14
    %p243 = scmp.lt.s32.totalorder %s14, 5
    %p244 = pnand %p242, %p243
    %p245 = pneg %p244
    // Predicated region
    $region37: #{tpu_custom_call.1} parent=5 // pred_check
      _
    $region38: #{tpu_custom_call.1} parent=5 // pred_check_branch
      %247 = sbr.rel (%p244) target = $region40
    $region39: #{tpu_custom_call.1} parent=5 // pred_region
      %s248 = ssub.s32 %s14, 1
      %s249 = smul.u32 16, %s19
      %p250 = scmp.lt.s32.totalorder %s249, 63
      %s251 = scalar_select %p250, %s249, 63
      %s252 = smul.addr %s251, 4
      %s253 = scalar_lea.vmem %s0, %s252
      %p254 = pneg %p40
      %p255 = pneg %p37
      %p256 = pneg %p61
      %p257 = pneg %p58
      %p258 = pneg %p82
      %p259 = pneg %p79
      %p260 = pneg %p103
      %p261 = pneg %p100
      %p262 = pneg %p124
      %p263 = pneg %p121
      %p264 = pneg %p150
      %p265 = pneg %p147
      %s266 = smul.u32 16, %s19
      %p267 = scmp.lt.s32.totalorder %s266, 63
      %s268 = scalar_select %p267, %s266, 63
      %s269 = smul.addr %s268, 4
      %s270 = scalar_lea.vmem %s5, %s269
      %p271 = pneg %p176
      %p272 = pneg %p173
      %s273 = smul.u32 16, %s19
      %p274 = scmp.lt.s32.totalorder %s273, 63
      %s275 = scalar_select %p274, %s273, 63
      %s276 = smul.addr %s275, 4
      %s277 = scalar_lea.vmem %s6, %s276
      %p278 = pneg %p202
      %p279 = pneg %p199
      %s280 = smul.u32 16, %s19
      %p281 = scmp.lt.s32.totalorder %s280, 63
      %s282 = scalar_select %p281, %s280, 63
      %s283 = smul.addr %s282, 4
      %s284 = scalar_lea.vmem %s7, %s283
      %s285 = smul.u32 16, %s19
      %p286 = scmp.lt.s32.totalorder %s285, 63
      %s287 = scalar_select %p286, %s285, 63
      %s288 = smul.addr %s287, 4
      %s289 = scalar_lea.vmem %s0, %s288
      %s290 = smul.u32 16, %s19
      %s291 = smul.u32 16, %s19
      %p292 = scmp.lt.s32.totalorder %s291, 63
      %s293 = scalar_select %p292, %s291, 63
      %s294 = smul.addr %s293, 4
      %s295 = scalar_lea.vmem %s5, %s294
      %s296 = smul.u32 16, %s19
      %s297 = smul.u32 16, %s19
      %p298 = scmp.lt.s32.totalorder %s297, 63
      %s299 = scalar_select %p298, %s297, 63
      %s300 = smul.addr %s299, 4
      %s301 = scalar_lea.vmem %s6, %s300
      %s302 = smul.u32 16, %s19
      %s303 = smul.u32 16, %s19
      %p304 = scmp.lt.s32.totalorder %s303, 63
      %s305 = scalar_select %p304, %s303, 63
      %s306 = smul.addr %s305, 4
      %s307 = scalar_lea.vmem %s7, %s306
      %s308 = smul.u32 16, %s19
      %v310 = vld [vmem:[%s289] sm:$0xf]
      %v311 = vld [vmem:[%s289 + $0x4] sm:$0xf]
      %v312 = vld [vmem:[%s289 + $0x8] sm:$0xf]
      %v313 = vld [vmem:[%s289 + $0xc] sm:$0xf]
      %v314 = vld [vmem:[%s289 + $0x10] sm:$0xf]
      %v315 = vld [vmem:[%s289 + $0x14] sm:$0xf]
      %v316 = vld [vmem:[%s289 + $0x18] sm:$0xf]
      %v317 = vld [vmem:[%s289 + $0x1c] sm:$0xf]
      %v318 = vld [vmem:[%s289 + $0x20] sm:$0xf]
      %v319 = vld [vmem:[%s289 + $0x24] sm:$0xf]
      %v320 = vld [vmem:[%s289 + $0x28] sm:$0xf]
      %v321 = vld [vmem:[%s289 + $0x2c] sm:$0xf]
      %v322 = vld [vmem:[%s289 + $0x30] sm:$0xf]
      %v323 = vld [vmem:[%s289 + $0x34] sm:$0xf]
      %v324 = vld [vmem:[%s289 + $0x38] sm:$0xf]
      %v325 = vld [vmem:[%s289 + $0x3c] sm:$0xf]
      %v326 = vld [vmem:[%s1] sm:$0xf]
      %v327 = vld [vmem:[%s1 + $0x4] sm:$0xf]
      %v328 = vld [vmem:[%s1 + $0x8] sm:$0xf]
      %v329 = vld [vmem:[%s1 + $0xc] sm:$0xf]
      %v330 = vld [vmem:[%s1 + $0x10] sm:$0xf]
      %v331 = vld [vmem:[%s1 + $0x14] sm:$0xf]
      %v332 = vld [vmem:[%s1 + $0x18] sm:$0xf]
      %v333 = vld [vmem:[%s1 + $0x1c] sm:$0xf]
      %v334 = vld [vmem:[%s2] sm:$0x1]
      %v336 = vlaneseq
      %v337 = vshrl.u32 %v336, 7
      %v338 = vsub.s32 0, %v337
      %v339 = vrot.slane %v334, %v338
      %v357 = vunpack.c.l.b16 %v310
      %v358 = vunpack.c.l.b16 %v311
      %v359 = vunpack.c.l.b16 %v312
      %v360 = vunpack.c.l.b16 %v313
      %v361 = vunpack.c.l.b16 %v314
      %v362 = vunpack.c.l.b16 %v315
      %v363 = vunpack.c.l.b16 %v316
      %v364 = vunpack.c.l.b16 %v317
      %v365 = vunpack.c.l.b16 %v318
      %v366 = vunpack.c.l.b16 %v319
      %v367 = vunpack.c.l.b16 %v320
      %v368 = vunpack.c.l.b16 %v321
      %v369 = vunpack.c.l.b16 %v322
      %v370 = vunpack.c.l.b16 %v323
      %v371 = vunpack.c.l.b16 %v324
      %v372 = vunpack.c.l.b16 %v325
      %v373 = vpack.c.b16 %v358, %v357
      %v374 = vpack.c.b16 %v360, %v359
      %v375 = vpack.c.b16 %v362, %v361
      %v376 = vpack.c.b16 %v364, %v363
      %v377 = vpack.c.b16 %v366, %v365
      %v378 = vpack.c.b16 %v368, %v367
      %v379 = vpack.c.b16 %v370, %v369
      %v380 = vpack.c.b16 %v372, %v371
      %v389 = vunpack.c.l.b16 %v326
      %v390 = vunpack.c.l.b16 %v327
      %v391 = vunpack.c.l.b16 %v328
      %v392 = vunpack.c.l.b16 %v329
      %v393 = vunpack.c.l.b16 %v330
      %v394 = vunpack.c.l.b16 %v331
      %v395 = vunpack.c.l.b16 %v332
      %v396 = vunpack.c.l.b16 %v333
      %v397 = vpack.c.b16 %v390, %v389
      %v398 = vpack.c.b16 %v392, %v391
      %v399 = vpack.c.b16 %v394, %v393
      %v400 = vpack.c.b16 %v396, %v395
      %vm405 = vcmask 523264
      %v407 = vsel %vm405, %v373, 0
      %v410 = vsel %vm405, %v374, 0
      %v413 = vsel %vm405, %v375, 0
      %v416 = vsel %vm405, %v376, 0
      %v419 = vsel %vm405, %v377, 0
      %v422 = vsel %vm405, %v378, 0
      %v425 = vsel %vm405, %v379, 0
      %v428 = vsel %vm405, %v380, 0
      %430 = vmatprep.subr.bf16.mxu0 0
      %431 = vmatpush1.bf16.msra.mxu0 %v397
      %432 = vmatprep.subr.bf16.mxu0 0
      %433 = vmatpush1.bf16.msra.mxu0 %v398
      %434 = vmatprep.subr.bf16.mxu0 0
      %435 = vmatpush1.bf16.msra.mxu0 %v399
      %436 = vmatprep.subr.bf16.mxu0 0
      %437 = vmatpush1.bf16.msra.mxu0 %v400
      %438 = vmatprep.subr.bf16.mxu0 0
      %439 = vmatpush1.bf16.msra.mxu0 0
      %440 = vmatprep.subr.bf16.mxu0 0
      %441 = vmatpush1.bf16.msra.mxu0 0
      %442 = vmatprep.subr.bf16.mxu0 0
      %443 = vmatpush1.bf16.msra.mxu0 0
      %444 = vmatprep.subr.bf16.mxu0 0
      %445 = vmatpush1.bf16.msra.mxu0 0
      %446 = vmatprep.subr.bf16.mxu0 0
      %447 = vmatpush1.bf16.msra.mxu0 0
      %448 = vmatprep.subr.bf16.mxu0 0
      %449 = vmatpush1.bf16.msra.mxu0 0
      %450 = vmatprep.subr.bf16.mxu0 0
      %451 = vmatpush1.bf16.msra.mxu0 0
      %452 = vmatprep.subr.bf16.mxu0 0
      %453 = vmatpush1.bf16.msra.mxu0 0
      %454 = vmatprep.subr.bf16.mxu0 0
      %455 = vmatpush1.bf16.msra.mxu0 0
      %456 = vmatprep.subr.bf16.mxu0 0
      %457 = vmatpush1.bf16.msra.mxu0 0
      %458 = vmatprep.subr.bf16.mxu0 0
      %459 = vmatpush1.bf16.msra.mxu0 0
      %460 = vmatprep.subr.bf16.mxu0 0
      %461 = vmatpush1.bf16.msra.mxu0 0
      %462 = vmatprep.mubr.bf16.mxu0 0
      %463 = vmatmul.mubr.bf16.gmra.mrb[0].mxu0 %v407
      %v464 = vpop.f32.mrb[0].mxu0
      %v465 = vadd.f32 %v339, %v464
      %v466 = vpop.f32.mrb[0].mxu0
      %v467 = vpop.f32.mrb[0].mxu0
      %v468 = vadd.f32 %v339, %v467
      %v469 = vpop.f32.mrb[0].mxu0
      %470 = vmatprep.mubr.bf16.mxu0 0
      %471 = vmatmul.mubr.bf16.gmra.mrb[0].mxu0 %v410
      %v472 = vpop.f32.mrb[0].mxu0
      %v473 = vadd.f32 %v339, %v472
      %v474 = vpop.f32.mrb[0].mxu0
      %v475 = vpop.f32.mrb[0].mxu0
      %v476 = vadd.f32 %v339, %v475
      %v477 = vpop.f32.mrb[0].mxu0
      %478 = vmatprep.mubr.bf16.mxu0 0
      %479 = vmatmul.mubr.bf16.gmra.mrb[0].mxu0 %v413
      %v480 = vpop.f32.mrb[0].mxu0
      %v481 = vadd.f32 %v339, %v480
      %v482 = vpop.f32.mrb[0].mxu0
      %v483 = vpop.f32.mrb[0].mxu0
      %v484 = vadd.f32 %v339, %v483
      %v485 = vpop.f32.mrb[0].mxu0
      %486 = vmatprep.mubr.bf16.mxu0 0
      %487 = vmatmul.mubr.bf16.gmra.mrb[0].mxu0 %v416
      %v488 = vpop.f32.mrb[0].mxu0
      %v489 = vadd.f32 %v339, %v488
      %v490 = vpop.f32.mrb[0].mxu0
      %v491 = vpop.f32.mrb[0].mxu0
      %v492 = vadd.f32 %v339, %v491
      %v493 = vpop.f32.mrb[0].mxu0
      %494 = vmatprep.mubr.bf16.mxu0 0
      %495 = vmatmul.mubr.bf16.gmra.mrb[0].mxu0 %v419
      %v496 = vpop.f32.mrb[0].mxu0
      %v497 = vadd.f32 %v339, %v496
      %v498 = vpop.f32.mrb[0].mxu0
      %v499 = vpop.f32.mrb[0].mxu0
      %v500 = vadd.f32 %v339, %v499
      %v501 = vpop.f32.mrb[0].mxu0
      %502 = vmatprep.mubr.bf16.mxu0 0
      %503 = vmatmul.mubr.bf16.gmra.mrb[0].mxu0 %v422
      %v504 = vpop.f32.mrb[0].mxu0
      %v505 = vadd.f32 %v339, %v504
      %v506 = vpop.f32.mrb[0].mxu0
      %v507 = vpop.f32.mrb[0].mxu0
      %v508 = vadd.f32 %v339, %v507
      %v509 = vpop.f32.mrb[0].mxu0
      %510 = vmatprep.mubr.bf16.mxu0 0
      %511 = vmatmul.mubr.bf16.gmra.mrb[0].mxu0 %v425
      %v512 = vpop.f32.mrb[0].mxu0
      %v513 = vadd.f32 %v339, %v512
      %v514 = vpop.f32.mrb[0].mxu0
      %v515 = vpop.f32.mrb[0].mxu0
      %v516 = vadd.f32 %v339, %v515
      %v517 = vpop.f32.mrb[0].mxu0
      %518 = vmatprep.mubr.bf16.mxu0 0
      %519 = vmatmul.mubr.bf16.gmra.mrb[0].mxu0 %v428
      %v520 = vpop.f32.mrb[0].mxu0
      %v521 = vadd.f32 %v339, %v520
      %v522 = vpop.f32.mrb[0].mxu0
      %v523 = vpop.f32.mrb[0].mxu0
      %v524 = vadd.f32 %v339, %v523
      %v525 = vpop.f32.mrb[0].mxu0
      %526 = vdwg.mxu0
      %v527 = vxor.u32 %v465, 2147483648
      %v528 = vxor.u32 %v468, 2147483648
      %v529 = vxor.u32 %v473, 2147483648
      %v530 = vxor.u32 %v476, 2147483648
      %v531 = vxor.u32 %v481, 2147483648
      %v532 = vxor.u32 %v484, 2147483648
      %v533 = vxor.u32 %v489, 2147483648
      %v534 = vxor.u32 %v492, 2147483648
      %v535 = vxor.u32 %v497, 2147483648
      %v536 = vxor.u32 %v500, 2147483648
      %v537 = vxor.u32 %v505, 2147483648
      %v538 = vxor.u32 %v508, 2147483648
      %v539 = vxor.u32 %v513, 2147483648
      %v540 = vxor.u32 %v516, 2147483648
      %v541 = vxor.u32 %v521, 2147483648
      %v542 = vxor.u32 %v524, 2147483648
      %v543 = vmul.f32 %v527, 1.442695
      %v544 = vpow.pop %v543
      %v545 = vmul.f32 %v528, 1.442695
      %v546 = vpow.pop %v545
      %v547 = vmul.f32 %v529, 1.442695
      %v548 = vpow.pop %v547
      %v549 = vmul.f32 %v530, 1.442695
      %v550 = vpow.pop %v549
      %v551 = vmul.f32 %v531, 1.442695
      %v552 = vpow.pop %v551
      %v553 = vmul.f32 %v532, 1.442695
      %v554 = vpow.pop %v553
      %v555 = vmul.f32 %v533, 1.442695
      %v556 = vpow.pop %v555
      %v557 = vmul.f32 %v534, 1.442695
      %v558 = vpow.pop %v557
      %v559 = vmul.f32 %v535, 1.442695
      %v560 = vpow.pop %v559
      %v561 = vmul.f32 %v536, 1.442695
      %v562 = vpow.pop %v561
      %v563 = vmul.f32 %v537, 1.442695
      %v564 = vpow.pop %v563
      %v565 = vmul.f32 %v538, 1.442695
      %v566 = vpow.pop %v565
      %v567 = vmul.f32 %v539, 1.442695
      %v568 = vpow.pop %v567
      %v569 = vmul.f32 %v540, 1.442695
      %v570 = vpow.pop %v569
      %v571 = vmul.f32 %v541, 1.442695
      %v572 = vpow.pop %v571
      %v573 = vmul.f32 %v542, 1.442695
      %v574 = vpow.pop %v573
      %v575 = vadd.f32 %v544, 1.0
      %v576 = vadd.f32 %v546, 1.0
      %v577 = vadd.f32 %v548, 1.0
      %v578 = vadd.f32 %v550, 1.0
      %v579 = vadd.f32 %v552, 1.0
      %v580 = vadd.f32 %v554, 1.0
      %v581 = vadd.f32 %v556, 1.0
      %v582 = vadd.f32 %v558, 1.0
      %v583 = vadd.f32 %v560, 1.0
      %v584 = vadd.f32 %v562, 1.0
      %v585 = vadd.f32 %v564, 1.0
      %v586 = vadd.f32 %v566, 1.0
      %v587 = vadd.f32 %v568, 1.0
      %v588 = vadd.f32 %v570, 1.0
      %v589 = vadd.f32 %v572, 1.0
      %v590 = vadd.f32 %v574, 1.0
      %v591 = vrcp.pop %v575
      %v592 = vmul.f32 1.0, %v591
      %v593 = vrcp.pop %v576
      %v594 = vmul.f32 1.0, %v593
      %v595 = vrcp.pop %v577
      %v596 = vmul.f32 1.0, %v595
      %v597 = vrcp.pop %v578
      %v598 = vmul.f32 1.0, %v597
      %v599 = vrcp.pop %v579
      %v600 = vmul.f32 1.0, %v599
      %v601 = vrcp.pop %v580
      %v602 = vmul.f32 1.0, %v601
      %v603 = vrcp.pop %v581
      %v604 = vmul.f32 1.0, %v603
      %v605 = vrcp.pop %v582
      %v606 = vmul.f32 1.0, %v605
      %v607 = vrcp.pop %v583
      %v608 = vmul.f32 1.0, %v607
      %v609 = vrcp.pop %v584
      %v610 = vmul.f32 1.0, %v609
      %v611 = vrcp.pop %v585
      %v612 = vmul.f32 1.0, %v611
      %v613 = vrcp.pop %v586
      %v614 = vmul.f32 1.0, %v613
      %v615 = vrcp.pop %v587
      %v616 = vmul.f32 1.0, %v615
      %v617 = vrcp.pop %v588
      %v618 = vmul.f32 1.0, %v617
      %v619 = vrcp.pop %v589
      %v620 = vmul.f32 1.0, %v619
      %v621 = vrcp.pop %v590
      %v622 = vmul.f32 1.0, %v621
      %v623 = vmul.f32 %v465, %v592
      %v624 = vmul.f32 %v468, %v594
      %v625 = vmul.f32 %v473, %v596
      %v626 = vmul.f32 %v476, %v598
      %v627 = vmul.f32 %v481, %v600
      %v628 = vmul.f32 %v484, %v602
      %v629 = vmul.f32 %v489, %v604
      %v630 = vmul.f32 %v492, %v606
      %v631 = vmul.f32 %v497, %v608
      %v632 = vmul.f32 %v500, %v610
      %v633 = vmul.f32 %v505, %v612
      %v634 = vmul.f32 %v508, %v614
      %v635 = vmul.f32 %v513, %v616
      %v636 = vmul.f32 %v516, %v618
      %v637 = vmul.f32 %v521, %v620
      %v638 = vmul.f32 %v524, %v622
      %v639 = vpack.c.bf16 %v624, %v623
      %v640 = vpack.c.bf16 %v626, %v625
      %v641 = vpack.c.bf16 %v628, %v627
      %v642 = vpack.c.bf16 %v630, %v629
      %v643 = vpack.c.bf16 %v632, %v631
      %v644 = vpack.c.bf16 %v634, %v633
      %v645 = vpack.c.bf16 %v636, %v635
      %v646 = vpack.c.bf16 %v638, %v637
      %v655 = vunpack.c.l.b16 %v639
      %v656 = vunpack.c.h.b16 %v639
      %v657 = vunpack.c.l.b16 %v640
      %v658 = vunpack.c.h.b16 %v640
      %v659 = vunpack.c.l.b16 %v641
      %v660 = vunpack.c.h.b16 %v641
      %v661 = vunpack.c.l.b16 %v642
      %v662 = vunpack.c.h.b16 %v642
      %v663 = vunpack.c.l.b16 %v643
      %v664 = vunpack.c.h.b16 %v643
      %v665 = vunpack.c.l.b16 %v644
      %v666 = vunpack.c.h.b16 %v644
      %v667 = vunpack.c.l.b16 %v645
      %v668 = vunpack.c.h.b16 %v645
      %v669 = vunpack.c.l.b16 %v646
      %v670 = vunpack.c.h.b16 %v646
      %v671 = vpack.c.b16 %v655, %v655
      %v672 = vpack.c.b16 %v656, %v656
      %v673 = vpack.c.b16 %v657, %v657
      %v674 = vpack.c.b16 %v658, %v658
      %v675 = vpack.c.b16 %v659, %v659
      %v676 = vpack.c.b16 %v660, %v660
      %v677 = vpack.c.b16 %v661, %v661
      %v678 = vpack.c.b16 %v662, %v662
      %v679 = vpack.c.b16 %v663, %v663
      %v680 = vpack.c.b16 %v664, %v664
      %v681 = vpack.c.b16 %v665, %v665
      %v682 = vpack.c.b16 %v666, %v666
      %v683 = vpack.c.b16 %v667, %v667
      %v684 = vpack.c.b16 %v668, %v668
      %v685 = vpack.c.b16 %v669, %v669
      %v686 = vpack.c.b16 %v670, %v670
      %vm703 = vcmask 257024
      %704 = vst.msk [vmem:[%s295] sm:$0xf] %vm703, %v671
      %705 = vst.msk [vmem:[%s295 + $0x4] sm:$0xf] %vm703, %v672
      %706 = vst.msk [vmem:[%s295 + $0x8] sm:$0xf] %vm703, %v673
      %707 = vst.msk [vmem:[%s295 + $0xc] sm:$0xf] %vm703, %v674
      %708 = vst.msk [vmem:[%s295 + $0x10] sm:$0xf] %vm703, %v675
      %709 = vst.msk [vmem:[%s295 + $0x14] sm:$0xf] %vm703, %v676
      %710 = vst.msk [vmem:[%s295 + $0x18] sm:$0xf] %vm703, %v677
      %711 = vst.msk [vmem:[%s295 + $0x1c] sm:$0xf] %vm703, %v678
      %712 = vst.msk [vmem:[%s295 + $0x20] sm:$0xf] %vm703, %v679
      %713 = vst.msk [vmem:[%s295 + $0x24] sm:$0xf] %vm703, %v680
      %714 = vst.msk [vmem:[%s295 + $0x28] sm:$0xf] %vm703, %v681
      %715 = vst.msk [vmem:[%s295 + $0x2c] sm:$0xf] %vm703, %v682
      %716 = vst.msk [vmem:[%s295 + $0x30] sm:$0xf] %vm703, %v683
      %717 = vst.msk [vmem:[%s295 + $0x34] sm:$0xf] %vm703, %v684
      %718 = vst.msk [vmem:[%s295 + $0x38] sm:$0xf] %vm703, %v685
      %719 = vst.msk [vmem:[%s295 + $0x3c] sm:$0xf] %vm703, %v686
      %720 = vrot.lane.b32.xlu0 %v671, 96
      %v721 = vpop.permute.xlu0 %720
      %722 = vrot.lane.b32.xlu0 %v672, 96
      %v723 = vpop.permute.xlu0 %722
      %724 = vrot.lane.b32.xlu0 %v673, 96
      %v725 = vpop.permute.xlu0 %724
      %726 = vrot.lane.b32.xlu0 %v674, 96
      %v727 = vpop.permute.xlu0 %726
      %728 = vrot.lane.b32.xlu0 %v675, 96
      %v729 = vpop.permute.xlu0 %728
      %730 = vrot.lane.b32.xlu0 %v676, 96
      %v731 = vpop.permute.xlu0 %730
      %732 = vrot.lane.b32.xlu0 %v677, 96
      %v733 = vpop.permute.xlu0 %732
      %734 = vrot.lane.b32.xlu0 %v678, 96
      %v735 = vpop.permute.xlu0 %734
      %736 = vrot.lane.b32.xlu0 %v679, 96
      %v737 = vpop.permute.xlu0 %736
      %738 = vrot.lane.b32.xlu0 %v680, 96
      %v739 = vpop.permute.xlu0 %738
      %740 = vrot.lane.b32.xlu0 %v681, 96
      %v741 = vpop.permute.xlu0 %740
      %742 = vrot.lane.b32.xlu0 %v682, 96
      %v743 = vpop.permute.xlu0 %742
      %744 = vrot.lane.b32.xlu0 %v683, 96
      %v745 = vpop.permute.xlu0 %744
      %746 = vrot.lane.b32.xlu0 %v684, 96
      %v747 = vpop.permute.xlu0 %746
      %748 = vrot.lane.b32.xlu0 %v685, 96
      %v749 = vpop.permute.xlu0 %748
      %750 = vrot.lane.b32.xlu0 %v686, 96
      %v751 = vpop.permute.xlu0 %750
      %768 = vst.msk [vmem:[%s301] sm:$0xf] %vm703, %v721
      %769 = vst.msk [vmem:[%s301 + $0x4] sm:$0xf] %vm703, %v723
      %770 = vst.msk [vmem:[%s301 + $0x8] sm:$0xf] %vm703, %v725
      %771 = vst.msk [vmem:[%s301 + $0xc] sm:$0xf] %vm703, %v727
      %772 = vst.msk [vmem:[%s301 + $0x10] sm:$0xf] %vm703, %v729
      %773 = vst.msk [vmem:[%s301 + $0x14] sm:$0xf] %vm703, %v731
      %774 = vst.msk [vmem:[%s301 + $0x18] sm:$0xf] %vm703, %v733
      %775 = vst.msk [vmem:[%s301 + $0x1c] sm:$0xf] %vm703, %v735
      %776 = vst.msk [vmem:[%s301 + $0x20] sm:$0xf] %vm703, %v737
      %777 = vst.msk [vmem:[%s301 + $0x24] sm:$0xf] %vm703, %v739
      %778 = vst.msk [vmem:[%s301 + $0x28] sm:$0xf] %vm703, %v741
      %779 = vst.msk [vmem:[%s301 + $0x2c] sm:$0xf] %vm703, %v743
      %780 = vst.msk [vmem:[%s301 + $0x30] sm:$0xf] %vm703, %v745
      %781 = vst.msk [vmem:[%s301 + $0x34] sm:$0xf] %vm703, %v747
      %782 = vst.msk [vmem:[%s301 + $0x38] sm:$0xf] %vm703, %v749
      %783 = vst.msk [vmem:[%s301 + $0x3c] sm:$0xf] %vm703, %v751
      %v784 = vld [vmem:[%s3] sm:$0xf]
      %v785 = vld [vmem:[%s3 + $0x4] sm:$0xf]
      %v786 = vld [vmem:[%s3 + $0x8] sm:$0xf]
      %v787 = vld [vmem:[%s3 + $0xc] sm:$0xf]
      %v788 = vld [vmem:[%s4] sm:$0x1]
      %v790 = vlaneseq
      %v791 = vshrl.u32 %v790, 7
      %v792 = vsub.s32 0, %v791
      %v793 = vrot.slane %v788, %v792
      %v799 = vunpack.c.l.b16 %v784
      %v800 = vunpack.c.l.b16 %v785
      %v801 = vunpack.c.l.b16 %v786
      %v802 = vunpack.c.l.b16 %v787
      %v803 = vpack.c.b16 %v800, %v799
      %v804 = vpack.c.b16 %v802, %v801
      %vm807 = vcmask 261120
      %v809 = vsel %vm807, %v639, 0
      %v812 = vsel %vm807, %v640, 0
      %v815 = vsel %vm807, %v641, 0
      %v818 = vsel %vm807, %v642, 0
      %v821 = vsel %vm807, %v643, 0
      %v824 = vsel %vm807, %v644, 0
      %v827 = vsel %vm807, %v645, 0
      %v830 = vsel %vm807, %v646, 0
      %832 = vmatprep.subr.bf16.mxu0 0
      %833 = vmatpush1.bf16.msra.mxu0 %v803
      %834 = vmatprep.subr.bf16.mxu0 0
      %835 = vmatpush1.bf16.msra.mxu0 %v804
      %836 = vmatprep.subr.bf16.mxu0 0
      %837 = vmatpush1.bf16.msra.mxu0 0
      %838 = vmatprep.subr.bf16.mxu0 0
      %839 = vmatpush1.bf16.msra.mxu0 0
      %840 = vmatprep.subr.bf16.mxu0 0
      %841 = vmatpush1.bf16.msra.mxu0 0
      %842 = vmatprep.subr.bf16.mxu0 0
      %843 = vmatpush1.bf16.msra.mxu0 0
      %844 = vmatprep.subr.bf16.mxu0 0
      %845 = vmatpush1.bf16.msra.mxu0 0
      %846 = vmatprep.subr.bf16.mxu0 0
      %847 = vmatpush1.bf16.msra.mxu0 0
      %848 = vmatprep.subr.bf16.mxu0 0
      %849 = vmatpush1.bf16.msra.mxu0 0
      %850 = vmatprep.subr.bf16.mxu0 0
      %851 = vmatpush1.bf16.msra.mxu0 0
      %852 = vmatprep.subr.bf16.mxu0 0
      %853 = vmatpush1.bf16.msra.mxu0 0
      %854 = vmatprep.subr.bf16.mxu0 0
      %855 = vmatpush1.bf16.msra.mxu0 0
      %856 = vmatprep.subr.bf16.mxu0 0
      %857 = vmatpush1.bf16.msra.mxu0 0
      %858 = vmatprep.subr.bf16.mxu0 0
      %859 = vmatpush1.bf16.msra.mxu0 0
      %860 = vmatprep.subr.bf16.mxu0 0
      %861 = vmatpush1.bf16.msra.mxu0 0
      %862 = vmatprep.subr.bf16.mxu0 0
      %863 = vmatpush1.bf16.msra.mxu0 0
      %864 = vmatprep.mubr.bf16.mxu0 0
      %865 = vmatmul.mubr.bf16.gmra.mrb[0].mxu0 %v809
      %v866 = vpop.f32.mrb[0].mxu0
      %v867 = vadd.f32 %v793, %v866
      %v868 = vpop.f32.mrb[0].mxu0
      %v869 = vpop.f32.mrb[0].mxu0
      %v870 = vadd.f32 %v793, %v869
      %v871 = vpop.f32.mrb[0].mxu0
      %872 = vmatprep.mubr.bf16.mxu0 0
      %873 = vmatmul.mubr.bf16.gmra.mrb[0].mxu0 %v812
      %v874 = vpop.f32.mrb[0].mxu0
      %v875 = vadd.f32 %v793, %v874
      %v876 = vpop.f32.mrb[0].mxu0
      %v877 = vpop.f32.mrb[0].mxu0
      %v878 = vadd.f32 %v793, %v877
      %v879 = vpop.f32.mrb[0].mxu0
      %880 = vmatprep.mubr.bf16.mxu0 0
      %881 = vmatmul.mubr.bf16.gmra.mrb[0].mxu0 %v815
      %v882 = vpop.f32.mrb[0].mxu0
      %v883 = vadd.f32 %v793, %v882
      %v884 = vpop.f32.mrb[0].mxu0
      %v885 = vpop.f32.mrb[0].mxu0
      %v886 = vadd.f32 %v793, %v885
      %v887 = vpop.f32.mrb[0].mxu0
      %888 = vmatprep.mubr.bf16.mxu0 0
      %889 = vmatmul.mubr.bf16.gmra.mrb[0].mxu0 %v818
      %v890 = vpop.f32.mrb[0].mxu0
      %v891 = vadd.f32 %v793, %v890
      %v892 = vpop.f32.mrb[0].mxu0
      %v893 = vpop.f32.mrb[0].mxu0
      %v894 = vadd.f32 %v793, %v893
      %v895 = vpop.f32.mrb[0].mxu0
      %896 = vmatprep.mubr.bf16.mxu0 0
      %897 = vmatmul.mubr.bf16.gmra.mrb[0].mxu0 %v821
      %v898 = vpop.f32.mrb[0].mxu0
      %v899 = vadd.f32 %v793, %v898
      %v900 = vpop.f32.mrb[0].mxu0
      %v901 = vpop.f32.mrb[0].mxu0
      %v902 = vadd.f32 %v793, %v901
      %v903 = vpop.f32.mrb[0].mxu0
      %904 = vmatprep.mubr.bf16.mxu0 0
      %905 = vmatmul.mubr.bf16.gmra.mrb[0].mxu0 %v824
      %v906 = vpop.f32.mrb[0].mxu0
      %v907 = vadd.f32 %v793, %v906
      %v908 = vpop.f32.mrb[0].mxu0
      %v909 = vpop.f32.mrb[0].mxu0
      %v910 = vadd.f32 %v793, %v909
      %v911 = vpop.f32.mrb[0].mxu0
      %912 = vmatprep.mubr.bf16.mxu0 0
      %913 = vmatmul.mubr.bf16.gmra.mrb[0].mxu0 %v827
      %v914 = vpop.f32.mrb[0].mxu0
      %v915 = vadd.f32 %v793, %v914
      %v916 = vpop.f32.mrb[0].mxu0
      %v917 = vpop.f32.mrb[0].mxu0
      %v918 = vadd.f32 %v793, %v917
      %v919 = vpop.f32.mrb[0].mxu0
      %920 = vmatprep.mubr.bf16.mxu0 0
      %921 = vmatmul.mubr.bf16.gmra.mrb[0].mxu0 %v830
      %v922 = vpop.f32.mrb[0].mxu0
      %v923 = vadd.f32 %v793, %v922
      %v924 = vpop.f32.mrb[0].mxu0
      %v925 = vpop.f32.mrb[0].mxu0
      %v926 = vadd.f32 %v793, %v925
      %v927 = vpop.f32.mrb[0].mxu0
      %928 = vdwg.mxu0
      %v929 = vxor.u32 %v867, 2147483648
      %v930 = vxor.u32 %v870, 2147483648
      %v931 = vxor.u32 %v875, 2147483648
      %v932 = vxor.u32 %v878, 2147483648
      %v933 = vxor.u32 %v883, 2147483648
      %v934 = vxor.u32 %v886, 2147483648
      %v935 = vxor.u32 %v891, 2147483648
      %v936 = vxor.u32 %v894, 2147483648
      %v937 = vxor.u32 %v899, 2147483648
      %v938 = vxor.u32 %v902, 2147483648
      %v939 = vxor.u32 %v907, 2147483648
      %v940 = vxor.u32 %v910, 2147483648
      %v941 = vxor.u32 %v915, 2147483648
      %v942 = vxor.u32 %v918, 2147483648
      %v943 = vxor.u32 %v923, 2147483648
      %v944 = vxor.u32 %v926, 2147483648
      %v945 = vmul.f32 %v929, 1.442695
      %v946 = vpow.pop %v945
      %v947 = vmul.f32 %v930, 1.442695
      %v948 = vpow.pop %v947
      %v949 = vmul.f32 %v931, 1.442695
      %v950 = vpow.pop %v949
      %v951 = vmul.f32 %v932, 1.442695
      %v952 = vpow.pop %v951
      %v953 = vmul.f32 %v933, 1.442695
      %v954 = vpow.pop %v953
      %v955 = vmul.f32 %v934, 1.442695
      %v956 = vpow.pop %v955
      %v957 = vmul.f32 %v935, 1.442695
      %v958 = vpow.pop %v957
      %v959 = vmul.f32 %v936, 1.442695
      %v960 = vpow.pop %v959
      %v961 = vmul.f32 %v937, 1.442695
      %v962 = vpow.pop %v961
      %v963 = vmul.f32 %v938, 1.442695
      %v964 = vpow.pop %v963
      %v965 = vmul.f32 %v939, 1.442695
      %v966 = vpow.pop %v965
      %v967 = vmul.f32 %v940, 1.442695
      %v968 = vpow.pop %v967
      %v969 = vmul.f32 %v941, 1.442695
      %v970 = vpow.pop %v969
      %v971 = vmul.f32 %v942, 1.442695
      %v972 = vpow.pop %v971
      %v973 = vmul.f32 %v943, 1.442695
      %v974 = vpow.pop %v973
      %v975 = vmul.f32 %v944, 1.442695
      %v976 = vpow.pop %v975
      %v977 = vadd.f32 %v946, 1.0
      %v978 = vadd.f32 %v948, 1.0
      %v979 = vadd.f32 %v950, 1.0
      %v980 = vadd.f32 %v952, 1.0
      %v981 = vadd.f32 %v954, 1.0
      %v982 = vadd.f32 %v956, 1.0
      %v983 = vadd.f32 %v958, 1.0
      %v984 = vadd.f32 %v960, 1.0
      %v985 = vadd.f32 %v962, 1.0
      %v986 = vadd.f32 %v964, 1.0
      %v987 = vadd.f32 %v966, 1.0
      %v988 = vadd.f32 %v968, 1.0
      %v989 = vadd.f32 %v970, 1.0
      %v990 = vadd.f32 %v972, 1.0
      %v991 = vadd.f32 %v974, 1.0
      %v992 = vadd.f32 %v976, 1.0
      %v993 = vrcp.pop %v977
      %v994 = vmul.f32 1.0, %v993
      %v995 = vrcp.pop %v978
      %v996 = vmul.f32 1.0, %v995
      %v997 = vrcp.pop %v979
      %v998 = vmul.f32 1.0, %v997
      %v999 = vrcp.pop %v980
      %v1000 = vmul.f32 1.0, %v999
      %v1001 = vrcp.pop %v981
      %v1002 = vmul.f32 1.0, %v1001
      %v1003 = vrcp.pop %v982
      %v1004 = vmul.f32 1.0, %v1003
      %v1005 = vrcp.pop %v983
      %v1006 = vmul.f32 1.0, %v1005
      %v1007 = vrcp.pop %v984
      %v1008 = vmul.f32 1.0, %v1007
      %v1009 = vrcp.pop %v985
      %v1010 = vmul.f32 1.0, %v1009
      %v1011 = vrcp.pop %v986
      %v1012 = vmul.f32 1.0, %v1011
      %v1013 = vrcp.pop %v987
      %v1014 = vmul.f32 1.0, %v1013
      %v1015 = vrcp.pop %v988
      %v1016 = vmul.f32 1.0, %v1015
      %v1017 = vrcp.pop %v989
      %v1018 = vmul.f32 1.0, %v1017
      %v1019 = vrcp.pop %v990
      %v1020 = vmul.f32 1.0, %v1019
      %v1021 = vrcp.pop %v991
      %v1022 = vmul.f32 1.0, %v1021
      %v1023 = vrcp.pop %v992
      %v1024 = vmul.f32 1.0, %v1023
      %v1025 = vmul.f32 %v867, %v994
      %v1026 = vmul.f32 %v870, %v996
      %v1027 = vmul.f32 %v875, %v998
      %v1028 = vmul.f32 %v878, %v1000
      %v1029 = vmul.f32 %v883, %v1002
      %v1030 = vmul.f32 %v886, %v1004
      %v1031 = vmul.f32 %v891, %v1006
      %v1032 = vmul.f32 %v894, %v1008
      %v1033 = vmul.f32 %v899, %v1010
      %v1034 = vmul.f32 %v902, %v1012
      %v1035 = vmul.f32 %v907, %v1014
      %v1036 = vmul.f32 %v910, %v1016
      %v1037 = vmul.f32 %v915, %v1018
      %v1038 = vmul.f32 %v918, %v1020
      %v1039 = vmul.f32 %v923, %v1022
      %v1040 = vmul.f32 %v926, %v1024
      %v1041 = vpack.c.bf16 %v1026, %v1025
      %v1042 = vpack.c.bf16 %v1028, %v1027
      %v1043 = vpack.c.bf16 %v1030, %v1029
      %v1044 = vpack.c.bf16 %v1032, %v1031
      %v1045 = vpack.c.bf16 %v1034, %v1033
      %v1046 = vpack.c.bf16 %v1036, %v1035
      %v1047 = vpack.c.bf16 %v1038, %v1037
      %v1048 = vpack.c.bf16 %v1040, %v1039
      %v1057 = vunpack.c.l.b16 %v1041
      %v1058 = vunpack.c.h.b16 %v1041
      %v1059 = vunpack.c.l.b16 %v1042
      %v1060 = vunpack.c.h.b16 %v1042
      %v1061 = vunpack.c.l.b16 %v1043
      %v1062 = vunpack.c.h.b16 %v1043
      %v1063 = vunpack.c.l.b16 %v1044
      %v1064 = vunpack.c.h.b16 %v1044
      %v1065 = vunpack.c.l.b16 %v1045
      %v1066 = vunpack.c.h.b16 %v1045
      %v1067 = vunpack.c.l.b16 %v1046
      %v1068 = vunpack.c.h.b16 %v1046
      %v1069 = vunpack.c.l.b16 %v1047
      %v1070 = vunpack.c.h.b16 %v1047
      %v1071 = vunpack.c.l.b16 %v1048
      %v1072 = vunpack.c.h.b16 %v1048
      %v1073 = vpack.c.b16 %v1057, %v1057
      %v1074 = vpack.c.b16 %v1058, %v1058
      %v1075 = vpack.c.b16 %v1059, %v1059
      %v1076 = vpack.c.b16 %v1060, %v1060
      %v1077 = vpack.c.b16 %v1061, %v1061
      %v1078 = vpack.c.b16 %v1062, %v1062
      %v1079 = vpack.c.b16 %v1063, %v1063
      %v1080 = vpack.c.b16 %v1064, %v1064
      %v1081 = vpack.c.b16 %v1065, %v1065
      %v1082 = vpack.c.b16 %v1066, %v1066
      %v1083 = vpack.c.b16 %v1067, %v1067
      %v1084 = vpack.c.b16 %v1068, %v1068
      %v1085 = vpack.c.b16 %v1069, %v1069
      %v1086 = vpack.c.b16 %v1070, %v1070
      %v1087 = vpack.c.b16 %v1071, %v1071
      %v1088 = vpack.c.b16 %v1072, %v1072
      %1105 = vst.msk [vmem:[%s307] sm:$0xf] %vm703, %v1073
      %1106 = vst.msk [vmem:[%s307 + $0x4] sm:$0xf] %vm703, %v1074
      %1107 = vst.msk [vmem:[%s307 + $0x8] sm:$0xf] %vm703, %v1075
      %1108 = vst.msk [vmem:[%s307 + $0xc] sm:$0xf] %vm703, %v1076
      %1109 = vst.msk [vmem:[%s307 + $0x10] sm:$0xf] %vm703, %v1077
      %1110 = vst.msk [vmem:[%s307 + $0x14] sm:$0xf] %vm703, %v1078
      %1111 = vst.msk [vmem:[%s307 + $0x18] sm:$0xf] %vm703, %v1079
      %1112 = vst.msk [vmem:[%s307 + $0x1c] sm:$0xf] %vm703, %v1080
      %1113 = vst.msk [vmem:[%s307 + $0x20] sm:$0xf] %vm703, %v1081
      %1114 = vst.msk [vmem:[%s307 + $0x24] sm:$0xf] %vm703, %v1082
      %1115 = vst.msk [vmem:[%s307 + $0x28] sm:$0xf] %vm703, %v1083
      %1116 = vst.msk [vmem:[%s307 + $0x2c] sm:$0xf] %vm703, %v1084
      %1117 = vst.msk [vmem:[%s307 + $0x30] sm:$0xf] %vm703, %v1085
      %1118 = vst.msk [vmem:[%s307 + $0x34] sm:$0xf] %vm703, %v1086
      %1119 = vst.msk [vmem:[%s307 + $0x38] sm:$0xf] %vm703, %v1087
      %1120 = vst.msk [vmem:[%s307 + $0x3c] sm:$0xf] %vm703, %v1088
      %s1121 = smul.u32 16, %s19
      %p1122 = scmp.lt.s32.totalorder %s1121, 63
      %s1123 = scalar_select %p1122, %s1121, 63
      %s1124 = smul.addr %s1123, 4
      %s1125 = scalar_lea.vmem %s5, %s1124
      %s1126 = smul.u32 16, %s19
      %p1127 = scmp.lt.s32.totalorder %s1126, 63
      %s1128 = scalar_select %p1127, %s1126, 63
      %s1129 = smul.addr %s1128, 4
      %s1130 = scalar_lea.vmem %s6, %s1129
      %s1131 = smul.u32 16, %s19
      %p1132 = scmp.lt.s32.totalorder %s1131, 63
      %s1133 = scalar_select %p1132, %s1131, 63
      %s1134 = smul.addr %s1133, 4
      %s1135 = scalar_lea.vmem %s7, %s1134
      // Predicated region
      $region41: #{tpu_custom_call.1} parent=39 // pred_check
        %p1136 = pneg %p147
      $region42: #{tpu_custom_call.1} parent=39 // pred_check_branch
        %1138 = sbr.rel (%p1136) target = $region44
      $region43: #{tpu_custom_call.1} parent=39 // pred_region
        %s1139 = smul.u32 16, %s19
      $region44: #{tpu_custom_call.1} parent=39 // pred_fallthru
        _
      // Predicated region
      $region45: #{tpu_custom_call.1} parent=39 // pred_check
        %p1140 = pneg %p173
      $region46: #{tpu_custom_call.1} parent=39 // pred_check_branch
        %1142 = sbr.rel (%p1140) target = $region48
      $region47: #{tpu_custom_call.1} parent=39 // pred_region
        %s1143 = smul.u32 16, %s19
      $region48: #{tpu_custom_call.1} parent=39 // pred_fallthru
        _
      // Predicated region
      $region49: #{tpu_custom_call.1} parent=39 // pred_check
        %p1144 = pneg %p199
      $region50: #{tpu_custom_call.1} parent=39 // pred_check_branch
        %1146 = sbr.rel (%p1144) target = $region52
      $region51: #{tpu_custom_call.1} parent=39 // pred_region
        %s1147 = smul.u32 16, %s19
      $region52: #{tpu_custom_call.1} parent=39 // pred_fallthru
        _
    $region40: #{tpu_custom_call.1} parent=5 // pred_fallthru
      _
    %p1148 = scmp.le.s32.totalorder 2, %s14
    // Predicated region
    $region53: #{tpu_custom_call.1} parent=5 // pred_check
      %p1149 = pneg %p1148
    $region54: #{tpu_custom_call.1} parent=5 // pred_check_branch
      %1151 = sbr.rel (%p1149) target = $region56
    $region55: #{tpu_custom_call.1} parent=5 // pred_region
      %s1152 = ssub.s32 %s14, 2
      // Predicated region
      $region57: #{tpu_custom_call.1} parent=55 // pred_check
        %p1153 = pneg %p153
      $region58: #{tpu_custom_call.1} parent=55 // pred_check_branch
        %1155 = sbr.rel (%p1153) target = $region60
      $region59: #{tpu_custom_call.1} parent=55 // pred_region
        %s1156 = smul.u32 16, %s20
        %p1157 = scmp.lt.s32.totalorder %s1156, 63
        %s1158 = scalar_select %p1157, %s1156, 63
        %s1159 = smul.addr %s1158, 4
        %s1160 = scalar_lea.vmem %s5, %s1159
      $region60: #{tpu_custom_call.1} parent=55 // pred_fallthru
        _
      // Predicated region
      $region61: #{tpu_custom_call.1} parent=55 // pred_check
        %p1161 = pneg %p179
      $region62: #{tpu_custom_call.1} parent=55 // pred_check_branch
        %1163 = sbr.rel (%p1161) target = $region64
      $region63: #{tpu_custom_call.1} parent=55 // pred_region
        %s1164 = smul.u32 16, %s20
        %p1165 = scmp.lt.s32.totalorder %s1164, 63
        %s1166 = scalar_select %p1165, %s1164, 63
        %s1167 = smul.addr %s1166, 4
        %s1168 = scalar_lea.vmem %s6, %s1167
      $region64: #{tpu_custom_call.1} parent=55 // pred_fallthru
        _
      // Predicated region
      $region65: #{tpu_custom_call.1} parent=55 // pred_check
        %p1169 = pneg %p205
      $region66: #{tpu_custom_call.1} parent=55 // pred_check_branch
        %1171 = sbr.rel (%p1169) target = $region68
      $region67: #{tpu_custom_call.1} parent=55 // pred_region
        %s1172 = smul.u32 16, %s20
        %p1173 = scmp.lt.s32.totalorder %s1172, 63
        %s1174 = scalar_select %p1173, %s1172, 63
        %s1175 = smul.addr %s1174, 4
        %s1176 = scalar_lea.vmem %s7, %s1175
      $region68: #{tpu_custom_call.1} parent=55 // pred_fallthru
        _
    $region56: #{tpu_custom_call.1} parent=5 // pred_fallthru
      _
  $region6: #{tpu_custom_call.1} parent=0 // loop_footer
    %s18 = sadd.s32 1, %s14
  $region7: #{tpu_custom_call.1} parent=0 // loop_footer_branch
    %13 = sbr.rel target = $region3
  $region8: #{tpu_custom_call.1} parent=0 // loop_exit
    _

</llo_original>
